<compile_context>
chip_gen: v7x
topology: tpu7x:2x2x1
jax: 0.10.0
libtpu: 0.0.40
codegen_flags: <defaults>
</compile_context>

<pallas_src>
import jax
import jax.numpy as jnp
from jax.experimental import pallas as pl
from jax.experimental.pallas import tpu as pltpu


def _ucert_re_loss_kernel(pred_ref, ucert_ref, target_ref, rgb_ref, out_ref):
    pred = pred_ref[...]      # (H, W)
    ucert = ucert_ref[...]    # (H, W)
    target = target_ref[...]  # (H, W)
    H, W = pred.shape

    # ---- masked weighted residual terms (L1 / L2 numerators + valid count) ----
    valid = target > 0.0
    scaled = jnp.where(valid, (target - pred) * (ucert + 1.0), 0.0)
    sabs = jnp.sum(jnp.abs(scaled))
    ssq = jnp.sum(scaled * scaled)
    cnt = jnp.sum(valid.astype(jnp.float32))

    # ---- edge-aware smoothness term ----
    # roll(x, n-1, axis) places x[i+1 (mod n)] at position i; the wrapped last
    # column / row is masked off below, reproducing x[..., :-1] - x[..., 1:]
    # without misaligned-slice VMEM copies (roll runs on the XLU slot).
    pred_dx = pred - pltpu.roll(pred, shift=W - 1, axis=1)   # cols 0..W-2 valid
    pred_dy = pred - pltpu.roll(pred, shift=H - 1, axis=0)   # rows 0..H-2 valid

    abs_img_dx = jnp.zeros((H, W), jnp.float32)
    abs_img_dy = jnp.zeros((H, W), jnp.float32)
    for ch in range(3):  # static unroll over RGB channels (2-D rolls only)
        c2d = rgb_ref[ch]                                     # (H, W)
        abs_img_dx = abs_img_dx + jnp.abs(c2d - pltpu.roll(c2d, shift=W - 1, axis=1))
        abs_img_dy = abs_img_dy + jnp.abs(c2d - pltpu.roll(c2d, shift=H - 1, axis=0))

    wx = jnp.exp(-(abs_img_dx / 3.0))   # (H, W), EUP
    wy = jnp.exp(-(abs_img_dy / 3.0))   # (H, W)

    col = jax.lax.broadcasted_iota(jnp.int32, (H, W), 1)
    row = jax.lax.broadcasted_iota(jnp.int32, (H, W), 0)
    sx = jnp.sum(jnp.where(col < W - 1, wx * jnp.abs(pred_dx), 0.0))
    sy = jnp.sum(jnp.where(row < H - 1, wy * jnp.abs(pred_dy), 0.0))

    # ---- lane-dense per-batch partials ----
    # Row q of the (8, 128) output block carries quantity q broadcast across
    # all 128 lanes (rows 5..7 are zero) -> one unmasked full-vreg store.
    r = jax.lax.broadcasted_iota(jnp.int32, (8, 128), 0)
    slab = jnp.where(r == 0, sabs, 0.0)
    slab = jnp.where(r == 1, ssq, slab)
    slab = jnp.where(r == 2, cnt, slab)
    slab = jnp.where(r == 3, sx, slab)
    slab = jnp.where(r == 4, sy, slab)
    out_ref[...] = slab


def ucert_re_loss_l1(pred, ucert, target, rgb):
    """pred/ucert/target: (N, 1, H, W) f32; rgb: (N, 3, H, W) f32 -> scalar loss."""
    N, C, H, W = pred.shape
    assert C == 1 and pred.shape == ucert.shape == target.shape
    assert rgb.shape == (N, 3, H, W)

    pred_s = pred[:, 0]
    ucert_s = ucert[:, 0]
    target_s = target[:, 0]

    img_spec = pl.BlockSpec((None, H, W), lambda b: (b, 0, 0))

    partials = pl.pallas_call(
        _ucert_re_loss_kernel,
        out_shape=jax.ShapeDtypeStruct((N, 8, 128), jnp.float32),
        grid_spec=pltpu.PrefetchScalarGridSpec(
            num_scalar_prefetch=0,
            grid=(N,),
            in_specs=[
                img_spec,  # pred
                img_spec,  # ucert
                img_spec,  # target
                pl.BlockSpec((None, 3, H, W), lambda b: (b, 0, 0, 0)),  # rgb
            ],
            out_specs=pl.BlockSpec((None, 8, 128), lambda b: (b, 0, 0)),
        ),
        compiler_params=pltpu.CompilerParams(
            dimension_semantics=("parallel",),
            vmem_limit_bytes=64 * 1024 * 1024,
        ),
    )(pred_s, ucert_s, target_s, rgb)

    # Tiny final reduction in plain JAX: lane 0 of each row holds the partials.
    totals = jnp.sum(partials[:, :, 0], axis=0)   # (8,)
    sabs, ssq, cnt, sx, sy = totals[0], totals[1], totals[2], totals[3], totals[4]

    lossl1 = sabs / cnt                           # mean over valid entries
    lossl2 = ssq / cnt
    smooth = sx / (N * H * (W - 1)) + sy / (N * (H - 1) * W)
    return lossl1 + lossl2 + 0.01 * smooth


def _reference(pred, ucert, target, rgb):
    """Pure-JAX reference matching the PyTorch forward."""
    valid = target > 0
    scaled = jnp.where(valid, (target - pred) * (ucert + 1.0), 0.0)
    cnt = jnp.sum(valid).astype(jnp.float32)
    lossl1 = jnp.sum(jnp.abs(scaled)) / cnt
    lossl2 = jnp.sum(scaled ** 2) / cnt
    pred_dx = pred[:, :, :, :-1] - pred[:, :, :, 1:]
    pred_dy = pred[:, :, :-1, :] - pred[:, :, 1:, :]
    img_dx = rgb[:, :, :, :-1] - rgb[:, :, :, 1:]
    img_dy = rgb[:, :, :-1, :] - rgb[:, :, 1:, :]
    wx = jnp.exp(-jnp.mean(jnp.abs(img_dx), axis=1, keepdims=True))
    wy = jnp.exp(-jnp.mean(jnp.abs(img_dy), axis=1, keepdims=True))
    smooth = jnp.mean(wx * jnp.abs(pred_dx)) + jnp.mean(wy * jnp.abs(pred_dy))
    return lossl1 + lossl2 + 0.01 * smooth


if __name__ == "__main__":
    key = jax.random.PRNGKey(0)
    k1, k2, k3, k4 = jax.random.split(key, 4)
    N, H, W = 2, 16, 16

    pred = jax.random.uniform(k1, (N, 1, H, W), jnp.float32)
    ucert = jax.random.uniform(k2, (N, 1, H, W), jnp.float32)
    # mix of valid (>0) and invalid (<=0) targets to exercise the mask
    target = jax.random.uniform(k3, (N, 1, H, W), jnp.float32,
                                minval=-0.3, maxval=1.0)
    rgb = jax.random.uniform(k4, (N, 3, H, W), jnp.float32)

    loss = jax.jit(ucert_re_loss_l1)(pred, ucert, target, rgb)
    jax.block_until_ready(loss)

    ref = _reference(pred, ucert, target, rgb)
    assert jnp.allclose(loss, ref, rtol=1e-5, atol=1e-5), (loss, ref)
    print("KERNEL_OK")
</pallas_src>

<mosaic_0001>
module attributes {stable_mosaic.version = 11 : i64} {
  func.func @_ucert_re_loss_kernel(%arg0: i32, %arg1: memref<1x16x16xf32, #tpu.memory_space<vmem>>, %arg2: memref<1x16x16xf32, #tpu.memory_space<vmem>>, %arg3: memref<1x16x16xf32, #tpu.memory_space<vmem>>, %arg4: memref<1x3x16x16xf32, #tpu.memory_space<vmem>>, %arg5: memref<1x8x128xf32, #tpu.memory_space<vmem>>) attributes {dimension_semantics = [#tpu.dimension_semantics<parallel>], iteration_bounds = array<i64: 2>, scalar_prefetch = 0 : i64, scratch_operands = 0 : i64, tpu.core_type = #tpu.core_type<tc>, window_params = [{transform_indices = @transform_0, window_bounds = array<i64: 1, 16, 16>}, {transform_indices = @transform_1, window_bounds = array<i64: 1, 16, 16>}, {transform_indices = @transform_2, window_bounds = array<i64: 1, 16, 16>}, {transform_indices = @transform_3, window_bounds = array<i64: 1, 3, 16, 16>}, {transform_indices = @transform_4, window_bounds = array<i64: 1, 8, 128>}]} {
    %c0 = arith.constant 0 : index
    %c0_0 = arith.constant 0 : index
    %c0_1 = arith.constant 0 : index
    %0 = vector.load %arg1[%c0, %c0_0, %c0_1] : memref<1x16x16xf32, #tpu.memory_space<vmem>>, vector<1x16x16xf32>
    %1 = vector.shape_cast %0 : vector<1x16x16xf32> to vector<16x16xf32>
    %c0_2 = arith.constant 0 : index
    %c0_3 = arith.constant 0 : index
    %c0_4 = arith.constant 0 : index
    %2 = vector.load %arg2[%c0_2, %c0_3, %c0_4] : memref<1x16x16xf32, #tpu.memory_space<vmem>>, vector<1x16x16xf32>
    %3 = vector.shape_cast %2 : vector<1x16x16xf32> to vector<16x16xf32>
    %c0_5 = arith.constant 0 : index
    %c0_6 = arith.constant 0 : index
    %c0_7 = arith.constant 0 : index
    %4 = vector.load %arg3[%c0_5, %c0_6, %c0_7] : memref<1x16x16xf32, #tpu.memory_space<vmem>>, vector<1x16x16xf32>
    %5 = vector.shape_cast %4 : vector<1x16x16xf32> to vector<16x16xf32>
    %cst = arith.constant 0.000000e+00 : f32
    %6 = vector.broadcast %cst : f32 to vector<16x16xf32>
    %7 = arith.cmpf ogt, %5, %6 : vector<16x16xf32>
    %8 = arith.subf %5, %1 : vector<16x16xf32>
    %cst_8 = arith.constant 1.000000e+00 : f32
    %9 = vector.broadcast %cst_8 : f32 to vector<16x16xf32>
    %10 = arith.addf %3, %9 : vector<16x16xf32>
    %11 = arith.mulf %8, %10 : vector<16x16xf32>
    %cst_9 = arith.constant 0.000000e+00 : f32
    %12 = vector.broadcast %cst_9 : f32 to vector<16x16xf32>
    %13 = arith.select %7, %11, %12 : vector<16x16xi1>, vector<16x16xf32>
    %14 = math.absf %13 : vector<16x16xf32>
    %15 = vector.shape_cast %14 : vector<16x16xf32> to vector<1x16x16xf32>
    %cst_10 = arith.constant dense<0.000000e+00> : vector<1xf32>
    %16 = vector.multi_reduction <add>, %15, %cst_10 [1, 2] : vector<1x16x16xf32> to vector<1xf32>
    %17 = vector.shape_cast %16 : vector<1xf32> to vector<1x1x1xf32>
    %18 = vector.extract %17[0, 0, 0] : f32 from vector<1x1x1xf32>
    %19 = arith.mulf %13, %13 : vector<16x16xf32>
    %20 = vector.shape_cast %19 : vector<16x16xf32> to vector<1x16x16xf32>
    %cst_11 = arith.constant dense<0.000000e+00> : vector<1xf32>
    %21 = vector.multi_reduction <add>, %20, %cst_11 [1, 2] : vector<1x16x16xf32> to vector<1xf32>
    %22 = vector.shape_cast %21 : vector<1xf32> to vector<1x1x1xf32>
    %23 = vector.extract %22[0, 0, 0] : f32 from vector<1x1x1xf32>
    %24 = arith.extui %7 : vector<16x16xi1> to vector<16x16xi32>
    %25 = arith.sitofp %24 : vector<16x16xi32> to vector<16x16xf32>
    %26 = vector.shape_cast %25 : vector<16x16xf32> to vector<1x16x16xf32>
    %cst_12 = arith.constant dense<0.000000e+00> : vector<1xf32>
    %27 = vector.multi_reduction <add>, %26, %cst_12 [1, 2] : vector<1x16x16xf32> to vector<1xf32>
    %28 = vector.shape_cast %27 : vector<1xf32> to vector<1x1x1xf32>
    %29 = vector.extract %28[0, 0, 0] : f32 from vector<1x1x1xf32>
    %c15_i32 = arith.constant 15 : i32
    %30 = tpu.dynamic_rotate %1 by %c15_i32 dim 1 : vector<16x16xf32>, i32 -> vector<16x16xf32>
    %31 = arith.subf %1, %30 : vector<16x16xf32>
    %c15_i32_13 = arith.constant 15 : i32
    %32 = tpu.dynamic_rotate %1 by %c15_i32_13 dim 0 : vector<16x16xf32>, i32 -> vector<16x16xf32>
    %33 = arith.subf %1, %32 : vector<16x16xf32>
    %cst_14 = arith.constant 0.000000e+00 : f32
    %34 = vector.broadcast %cst_14 : f32 to vector<16x16xf32>
    %cst_15 = arith.constant 0.000000e+00 : f32
    %35 = vector.broadcast %cst_15 : f32 to vector<16x16xf32>
    %c0_16 = arith.constant 0 : index
    %c0_17 = arith.constant 0 : index
    %c0_18 = arith.constant 0 : index
    %c0_19 = arith.constant 0 : index
    %36 = vector.load %arg4[%c0_16, %c0_17, %c0_18, %c0_19] : memref<1x3x16x16xf32, #tpu.memory_space<vmem>>, vector<1x1x16x16xf32>
    %37 = vector.shape_cast %36 : vector<1x1x16x16xf32> to vector<16x16xf32>
    %c15_i32_20 = arith.constant 15 : i32
    %38 = tpu.dynamic_rotate %37 by %c15_i32_20 dim 1 : vector<16x16xf32>, i32 -> vector<16x16xf32>
    %39 = arith.subf %37, %38 : vector<16x16xf32>
    %40 = math.absf %39 : vector<16x16xf32>
    %41 = arith.addf %34, %40 : vector<16x16xf32>
    %c15_i32_21 = arith.constant 15 : i32
    %42 = tpu.dynamic_rotate %37 by %c15_i32_21 dim 0 : vector<16x16xf32>, i32 -> vector<16x16xf32>
    %43 = arith.subf %37, %42 : vector<16x16xf32>
    %44 = math.absf %43 : vector<16x16xf32>
    %45 = arith.addf %35, %44 : vector<16x16xf32>
    %c0_22 = arith.constant 0 : index
    %c1 = arith.constant 1 : index
    %c0_23 = arith.constant 0 : index
    %c0_24 = arith.constant 0 : index
    %46 = vector.load %arg4[%c0_22, %c1, %c0_23, %c0_24] : memref<1x3x16x16xf32, #tpu.memory_space<vmem>>, vector<1x1x16x16xf32>
    %47 = vector.shape_cast %46 : vector<1x1x16x16xf32> to vector<16x16xf32>
    %c15_i32_25 = arith.constant 15 : i32
    %48 = tpu.dynamic_rotate %47 by %c15_i32_25 dim 1 : vector<16x16xf32>, i32 -> vector<16x16xf32>
    %49 = arith.subf %47, %48 : vector<16x16xf32>
    %50 = math.absf %49 : vector<16x16xf32>
    %51 = arith.addf %41, %50 : vector<16x16xf32>
    %c15_i32_26 = arith.constant 15 : i32
    %52 = tpu.dynamic_rotate %47 by %c15_i32_26 dim 0 : vector<16x16xf32>, i32 -> vector<16x16xf32>
    %53 = arith.subf %47, %52 : vector<16x16xf32>
    %54 = math.absf %53 : vector<16x16xf32>
    %55 = arith.addf %45, %54 : vector<16x16xf32>
    %c0_27 = arith.constant 0 : index
    %c2 = arith.constant 2 : index
    %c0_28 = arith.constant 0 : index
    %c0_29 = arith.constant 0 : index
    %56 = vector.load %arg4[%c0_27, %c2, %c0_28, %c0_29] : memref<1x3x16x16xf32, #tpu.memory_space<vmem>>, vector<1x1x16x16xf32>
    %57 = vector.shape_cast %56 : vector<1x1x16x16xf32> to vector<16x16xf32>
    %c15_i32_30 = arith.constant 15 : i32
    %58 = tpu.dynamic_rotate %57 by %c15_i32_30 dim 1 : vector<16x16xf32>, i32 -> vector<16x16xf32>
    %59 = arith.subf %57, %58 : vector<16x16xf32>
    %60 = math.absf %59 : vector<16x16xf32>
    %61 = arith.addf %51, %60 : vector<16x16xf32>
    %c15_i32_31 = arith.constant 15 : i32
    %62 = tpu.dynamic_rotate %57 by %c15_i32_31 dim 0 : vector<16x16xf32>, i32 -> vector<16x16xf32>
    %63 = arith.subf %57, %62 : vector<16x16xf32>
    %64 = math.absf %63 : vector<16x16xf32>
    %65 = arith.addf %55, %64 : vector<16x16xf32>
    %cst_32 = arith.constant 3.000000e+00 : f32
    %66 = vector.broadcast %cst_32 : f32 to vector<16x16xf32>
    %67 = arith.divf %61, %66 : vector<16x16xf32>
    %cst_33 = arith.constant 0.000000e+00 : f32
    %68 = vector.broadcast %cst_33 : f32 to vector<16x16xf32>
    %69 = arith.subf %68, %67 : vector<16x16xf32>
    %70 = math.exp %69 : vector<16x16xf32>
    %cst_34 = arith.constant 3.000000e+00 : f32
    %71 = vector.broadcast %cst_34 : f32 to vector<16x16xf32>
    %72 = arith.divf %65, %71 : vector<16x16xf32>
    %cst_35 = arith.constant 0.000000e+00 : f32
    %73 = vector.broadcast %cst_35 : f32 to vector<16x16xf32>
    %74 = arith.subf %73, %72 : vector<16x16xf32>
    %75 = math.exp %74 : vector<16x16xf32>
    %76 = tpu.iota {dimensions = array<i32: 1>} : vector<16x16xi32>
    %77 = tpu.iota {dimensions = array<i32: 0>} : vector<16x16xi32>
    %c15_i32_36 = arith.constant 15 : i32
    %78 = vector.broadcast %c15_i32_36 : i32 to vector<16x16xi32>
    %79 = arith.cmpi slt, %76, %78 : vector<16x16xi32>
    %80 = math.absf %31 : vector<16x16xf32>
    %81 = arith.mulf %70, %80 : vector<16x16xf32>
    %cst_37 = arith.constant 0.000000e+00 : f32
    %82 = vector.broadcast %cst_37 : f32 to vector<16x16xf32>
    %83 = arith.select %79, %81, %82 : vector<16x16xi1>, vector<16x16xf32>
    %84 = vector.shape_cast %83 : vector<16x16xf32> to vector<1x16x16xf32>
    %cst_38 = arith.constant dense<0.000000e+00> : vector<1xf32>
    %85 = vector.multi_reduction <add>, %84, %cst_38 [1, 2] : vector<1x16x16xf32> to vector<1xf32>
    %86 = vector.shape_cast %85 : vector<1xf32> to vector<1x1x1xf32>
    %87 = vector.extract %86[0, 0, 0] : f32 from vector<1x1x1xf32>
    %c15_i32_39 = arith.constant 15 : i32
    %88 = vector.broadcast %c15_i32_39 : i32 to vector<16x16xi32>
    %89 = arith.cmpi slt, %77, %88 : vector<16x16xi32>
    %90 = math.absf %33 : vector<16x16xf32>
    %91 = arith.mulf %75, %90 : vector<16x16xf32>
    %cst_40 = arith.constant 0.000000e+00 : f32
    %92 = vector.broadcast %cst_40 : f32 to vector<16x16xf32>
    %93 = arith.select %89, %91, %92 : vector<16x16xi1>, vector<16x16xf32>
    %94 = vector.shape_cast %93 : vector<16x16xf32> to vector<1x16x16xf32>
    %cst_41 = arith.constant dense<0.000000e+00> : vector<1xf32>
    %95 = vector.multi_reduction <add>, %94, %cst_41 [1, 2] : vector<1x16x16xf32> to vector<1xf32>
    %96 = vector.shape_cast %95 : vector<1xf32> to vector<1x1x1xf32>
    %97 = vector.extract %96[0, 0, 0] : f32 from vector<1x1x1xf32>
    %98 = tpu.iota {dimensions = array<i32: 0>} : vector<8x128xi32>
    %c0_i32 = arith.constant 0 : i32
    %99 = vector.broadcast %c0_i32 : i32 to vector<8x128xi32>
    %100 = arith.cmpi eq, %98, %99 : vector<8x128xi32>
    %cst_42 = arith.constant 0.000000e+00 : f32
    %101 = vector.broadcast %18 : f32 to vector<8x128xf32>
    %102 = vector.broadcast %cst_42 : f32 to vector<8x128xf32>
    %103 = arith.select %100, %101, %102 : vector<8x128xi1>, vector<8x128xf32>
    %c1_i32 = arith.constant 1 : i32
    %104 = vector.broadcast %c1_i32 : i32 to vector<8x128xi32>
    %105 = arith.cmpi eq, %98, %104 : vector<8x128xi32>
    %106 = vector.broadcast %23 : f32 to vector<8x128xf32>
    %107 = arith.select %105, %106, %103 : vector<8x128xi1>, vector<8x128xf32>
    %c2_i32 = arith.constant 2 : i32
    %108 = vector.broadcast %c2_i32 : i32 to vector<8x128xi32>
    %109 = arith.cmpi eq, %98, %108 : vector<8x128xi32>
    %110 = vector.broadcast %29 : f32 to vector<8x128xf32>
    %111 = arith.select %109, %110, %107 : vector<8x128xi1>, vector<8x128xf32>
    %c3_i32 = arith.constant 3 : i32
    %112 = vector.broadcast %c3_i32 : i32 to vector<8x128xi32>
    %113 = arith.cmpi eq, %98, %112 : vector<8x128xi32>
    %114 = vector.broadcast %87 : f32 to vector<8x128xf32>
    %115 = arith.select %113, %114, %111 : vector<8x128xi1>, vector<8x128xf32>
    %c4_i32 = arith.constant 4 : i32
    %116 = vector.broadcast %c4_i32 : i32 to vector<8x128xi32>
    %117 = arith.cmpi eq, %98, %116 : vector<8x128xi32>
    %118 = vector.broadcast %97 : f32 to vector<8x128xf32>
    %119 = arith.select %117, %118, %115 : vector<8x128xi1>, vector<8x128xf32>
    %c0_43 = arith.constant 0 : index
    %c0_44 = arith.constant 0 : index
    %c0_45 = arith.constant 0 : index
    %120 = vector.load %arg5[%c0_43, %c0_44, %c0_45] : memref<1x8x128xf32, #tpu.memory_space<vmem>>, vector<1x8x128xf32>
    %121 = vector.shape_cast %120 : vector<1x8x128xf32> to vector<8x128xf32>
    %122 = vector.shape_cast %119 : vector<8x128xf32> to vector<1x8x128xf32>
    tpu.vector_store %arg5[%c0_43, %c0_44, %c0_45], %122 {strides = array<i32>} : memref<1x8x128xf32, #tpu.memory_space<vmem>>, vector<1x8x128xf32>,
    return
  }
  func.func @transform_0(%arg0: i32) -> (i32, i32, i32) {
    %c0_i32 = arith.constant 0 : i32
    %c0_i32_0 = arith.constant 0 : i32
    %c0_i32_1 = arith.constant 0 : i32
    return %arg0, %c0_i32, %c0_i32_0 : i32, i32, i32
  }
  func.func @transform_1(%arg0: i32) -> (i32, i32, i32) {
    %c0_i32 = arith.constant 0 : i32
    %c0_i32_0 = arith.constant 0 : i32
    %c0_i32_1 = arith.constant 0 : i32
    return %arg0, %c0_i32, %c0_i32_0 : i32, i32, i32
  }
  func.func @transform_2(%arg0: i32) -> (i32, i32, i32) {
    %c0_i32 = arith.constant 0 : i32
    %c0_i32_0 = arith.constant 0 : i32
    %c0_i32_1 = arith.constant 0 : i32
    return %arg0, %c0_i32, %c0_i32_0 : i32, i32, i32
  }
  func.func @transform_3(%arg0: i32) -> (i32, i32, i32, i32) {
    %c0_i32 = arith.constant 0 : i32
    %c0_i32_0 = arith.constant 0 : i32
    %c0_i32_1 = arith.constant 0 : i32
    %c0_i32_2 = arith.constant 0 : i32
    return %arg0, %c0_i32, %c0_i32_0, %c0_i32_1 : i32, i32, i32, i32
  }
  func.func @transform_4(%arg0: i32) -> (i32, i32, i32) {
    %c0_i32 = arith.constant 0 : i32
    %c0_i32_0 = arith.constant 0 : i32
    %c0_i32_1 = arith.constant 0 : i32
    return %arg0, %c0_i32, %c0_i32_0 : i32, i32, i32
  }
}

</mosaic_0001>

<llo_original>
// kernel: ucert_re_loss_l1.1
$region0: #{ucert_re_loss_l1.1}
  #allocation0 [shape = 'u32[]', space=smem, size = 0x4, offset = 0x4, fixed_abs, tag = 'smem constant byte address 0x4 - core index']
  #allocation1 [shape = 'u32[144,128]{1,0:T(1,128)}', space=vmem, size = 0x12000, scoped, tag = 'internal scratch']
  %s0 = inlined_call_operand.hbm [shape: f32[2,16,16], index: 0, kind: input, shape index: {}]
  %s1 = inlined_call_operand.hbm [shape: f32[2,16,16], index: 1, kind: input, shape index: {}]
  %s2 = inlined_call_operand.hbm [shape: f32[2,16,16], index: 2, kind: input, shape index: {}]
  %s3 = inlined_call_operand.hbm [shape: f32[2,3,16,16], index: 3, kind: input, shape index: {}]
  %s4 = inlined_call_operand.hbm [shape: f32[2,8,128], index: 4, kind: output, shape index: {}]
  %s5 = sld [smem:[#allocation0]]
  $region65: #{ucert_re_loss_l1.1} parent=0
    _
  %s7 = ssub.s32 1, %s5
  %s8 = scalar_select 0, %s7, %s5
  $region1: #{ucert_re_loss_l1.1} parent=0
    #allocation2 [shape = 'u8[16384]{0}', space=vmem, size = 0x4000, scoped, tag = 'input window, operand 0']
    #allocation3 [shape = 's32[2]{0}', space=sflag, size = 0x8, scoped, tag = 'scoped memory for ucert_re_loss_l1.1']
    #allocation4 [shape = 's32[2]{0}', space=sflag, size = 0x8, scoped, tag = 'scoped memory for ucert_re_loss_l1.1']
    #allocation5 [shape = 'u8[16384]{0}', space=vmem, size = 0x4000, scoped, tag = 'input window, operand 1']
    #allocation6 [shape = 's32[2]{0}', space=sflag, size = 0x8, scoped, tag = 'scoped memory for ucert_re_loss_l1.1']
    #allocation7 [shape = 'u8[16384]{0}', space=vmem, size = 0x4000, scoped, tag = 'input window, operand 2']
    #allocation8 [shape = 'u8[49152]{0}', space=vmem, size = 0xc000, scoped, tag = 'input window, operand 3']
    #allocation9 [shape = 's32[2]{0}', space=sflag, size = 0x8, scoped, tag = 'scoped memory for ucert_re_loss_l1.1']
    #allocation10 [shape = 'u8[8192]{0}', space=vmem, size = 0x2000, scoped, tag = 'output window, operand 0']
    %9 = vsyncpa [#allocation3], 0
    %s10 = scalar_lea.sflag [#allocation3], 1
    %11 = vsyncpa %s10, 0
    %12 = vsyncpa [#allocation6], 0
    %s13 = scalar_lea.sflag [#allocation6], 1
    %14 = vsyncpa %s13, 0
    %15 = vsyncpa [#allocation9], 0
    %s16 = scalar_lea.sflag [#allocation9], 1
    %17 = vsyncpa %s16, 0
    %18 = vsyncpa [#allocation4], 0
    %s19 = scalar_lea.sflag [#allocation4], 1
    %20 = vsyncpa %s19, 0
    loop: start=0, step=1, limit=4
    $region2: #{ucert_re_loss_l1.1} parent=1 // loop_pre_header
      _
    $region3: #{ucert_re_loss_l1.1} parent=1 // loop_header
      %s22 = sphi 0, %s26
      %p23 = scmp.ge.s32.totalorder %s22, 4
      %s32 = sphi 0, %s34
      %s35 = sphi 0, %s32
      %s36 = sphi 0, %s35
      %s52 = sphi 0, %s36
      %s58 = sphi 0, %s60
      %s61 = sphi 0, %s58
      %s62 = sphi 0, %s61
      %s78 = sphi 0, %s62
      %s84 = sphi 0, %s86
      %s87 = sphi 0, %s84
      %s88 = sphi 0, %s87
      %s104 = sphi 0, %s88
      %s110 = sphi 0, %s112
      %s113 = sphi 0, %s110
      %s114 = sphi 0, %s113
      %s130 = sphi 0, %s114
      %s136 = sphi 0, %s138
      %s139 = sphi 0, %s136
      %s140 = sphi 0, %s139
      %s156 = sphi 0, %s140
    $region4: #{ucert_re_loss_l1.1} parent=1 // loop_header_branch
      %25 = sbr.rel (%p23) target = $region8
    $region5: #{ucert_re_loss_l1.1} parent=1 // loop_body
      %s27 = ssub.s32 %s22, 1
      %s28 = ssub.s32 %s22, 2
      %s29 = sadd.s32 %s22, 1
      %s30 = ssub.s32 %s22, %s29
      %p31 = scmp.eq.s32.totalorder %s30, 0
      %s33 = sadd.s32 %s32, 1
      %s34 = scalar_select %p31, %s32, %s33
      %p37 = pneg %p31
      %p38 = scmp.eq.s32.totalorder %s22, 1
      %p39 = por %p37, %p38
      %p40 = scmp.ne.s32.totalorder %s32, %s35
      %p41 = scmp.eq.s32.totalorder %s22, 0
      %p42 = por %p40, %p41
      %p43 = scmp.ne.s32.totalorder %s32, %s35
      %p44 = scmp.eq.s32.totalorder %s27, 1
      %p45 = por %p43, %p44
      %p46 = scmp.ne.s32.totalorder %s35, %s36
      %p47 = scmp.eq.s32.totalorder %s27, 0
      %p48 = por %p46, %p47
      %p49 = scmp.ne.s32.totalorder %s35, %s36
      %p50 = scmp.eq.s32.totalorder %s28, 1
      %p51 = por %p49, %p50
      %p53 = scmp.ne.s32.totalorder %s36, %s52
      %p54 = scmp.eq.s32.totalorder %s28, 0
      %p55 = por %p53, %p54
      %s56 = ssub.s32 %s22, %s29
      %p57 = scmp.eq.s32.totalorder %s56, 0
      %s59 = sadd.s32 %s58, 1
      %s60 = scalar_select %p57, %s58, %s59
      %p63 = pneg %p57
      %p64 = scmp.eq.s32.totalorder %s22, 1
      %p65 = por %p63, %p64
      %p66 = scmp.ne.s32.totalorder %s58, %s61
      %p67 = scmp.eq.s32.totalorder %s22, 0
      %p68 = por %p66, %p67
      %p69 = scmp.ne.s32.totalorder %s58, %s61
      %p70 = scmp.eq.s32.totalorder %s27, 1
      %p71 = por %p69, %p70
      %p72 = scmp.ne.s32.totalorder %s61, %s62
      %p73 = scmp.eq.s32.totalorder %s27, 0
      %p74 = por %p72, %p73
      %p75 = scmp.ne.s32.totalorder %s61, %s62
      %p76 = scmp.eq.s32.totalorder %s28, 1
      %p77 = por %p75, %p76
      %p79 = scmp.ne.s32.totalorder %s62, %s78
      %p80 = scmp.eq.s32.totalorder %s28, 0
      %p81 = por %p79, %p80
      %s82 = ssub.s32 %s22, %s29
      %p83 = scmp.eq.s32.totalorder %s82, 0
      %s85 = sadd.s32 %s84, 1
      %s86 = scalar_select %p83, %s84, %s85
      %p89 = pneg %p83
      %p90 = scmp.eq.s32.totalorder %s22, 1
      %p91 = por %p89, %p90
      %p92 = scmp.ne.s32.totalorder %s84, %s87
      %p93 = scmp.eq.s32.totalorder %s22, 0
      %p94 = por %p92, %p93
      %p95 = scmp.ne.s32.totalorder %s84, %s87
      %p96 = scmp.eq.s32.totalorder %s27, 1
      %p97 = por %p95, %p96
      %p98 = scmp.ne.s32.totalorder %s87, %s88
      %p99 = scmp.eq.s32.totalorder %s27, 0
      %p100 = por %p98, %p99
      %p101 = scmp.ne.s32.totalorder %s87, %s88
      %p102 = scmp.eq.s32.totalorder %s28, 1
      %p103 = por %p101, %p102
      %p105 = scmp.ne.s32.totalorder %s88, %s104
      %p106 = scmp.eq.s32.totalorder %s28, 0
      %p107 = por %p105, %p106
      %s108 = ssub.s32 %s22, %s29
      %p109 = scmp.eq.s32.totalorder %s108, 0
      %s111 = sadd.s32 %s110, 1
      %s112 = scalar_select %p109, %s110, %s111
      %p115 = pneg %p109
      %p116 = scmp.eq.s32.totalorder %s22, 1
      %p117 = por %p115, %p116
      %p118 = scmp.ne.s32.totalorder %s110, %s113
      %p119 = scmp.eq.s32.totalorder %s22, 0
      %p120 = por %p118, %p119
      %p121 = scmp.ne.s32.totalorder %s110, %s113
      %p122 = scmp.eq.s32.totalorder %s27, 1
      %p123 = por %p121, %p122
      %p124 = scmp.ne.s32.totalorder %s113, %s114
      %p125 = scmp.eq.s32.totalorder %s27, 0
      %p126 = por %p124, %p125
      %p127 = scmp.ne.s32.totalorder %s113, %s114
      %p128 = scmp.eq.s32.totalorder %s28, 1
      %p129 = por %p127, %p128
      %p131 = scmp.ne.s32.totalorder %s114, %s130
      %p132 = scmp.eq.s32.totalorder %s28, 0
      %p133 = por %p131, %p132
      %s134 = ssub.s32 %s22, %s29
      %p135 = scmp.eq.s32.totalorder %s134, 0
      %s137 = sadd.s32 %s136, 1
      %s138 = scalar_select %p135, %s136, %s137
      %p141 = pneg %p135
      %p142 = scmp.eq.s32.totalorder %s22, 1
      %p143 = por %p141, %p142
      %p144 = scmp.ne.s32.totalorder %s136, %s139
      %p145 = scmp.eq.s32.totalorder %s22, 0
      %p146 = por %p144, %p145
      %p147 = scmp.ne.s32.totalorder %s136, %s139
      %p148 = scmp.eq.s32.totalorder %s27, 1
      %p149 = por %p147, %p148
      %p150 = scmp.ne.s32.totalorder %s139, %s140
      %p151 = scmp.eq.s32.totalorder %s27, 0
      %p152 = por %p150, %p151
      %p153 = scmp.ne.s32.totalorder %s139, %s140
      %p154 = scmp.eq.s32.totalorder %s28, 1
      %p155 = por %p153, %p154
      %p157 = scmp.ne.s32.totalorder %s140, %s156
      %p158 = scmp.eq.s32.totalorder %s28, 0
      %p159 = por %p157, %p158
      %p160 = scmp.le.s32.totalorder 1, %s22
      %p161 = scmp.lt.s32.totalorder %s22, 3
      %p162 = pnand %p160, %p161
      %p163 = pneg %p162
      // Predicated region
      $region9: #{ucert_re_loss_l1.1} parent=5 // pred_check
        _
      $region10: #{ucert_re_loss_l1.1} parent=5 // pred_check_branch
        %165 = sbr.rel (%p162) target = $region12
      $region11: #{ucert_re_loss_l1.1} parent=5 // pred_region
        %s166 = ssub.s32 %s22, 1
      $region12: #{ucert_re_loss_l1.1} parent=5 // pred_fallthru
        _
      %p167 = scmp.lt.s32.totalorder %s22, 2
      // Predicated region
      $region13: #{ucert_re_loss_l1.1} parent=5 // pred_check
        %p168 = pneg %p167
      $region14: #{ucert_re_loss_l1.1} parent=5 // pred_check_branch
        %170 = sbr.rel (%p168) target = $region16
      $region15: #{ucert_re_loss_l1.1} parent=5 // pred_region
        // Predicated region
        $region17: #{ucert_re_loss_l1.1} parent=15 // pred_check
          %p171 = pneg %p42
        $region18: #{ucert_re_loss_l1.1} parent=15 // pred_check_branch
          %173 = sbr.rel (%p171) target = $region20
        $region19: #{ucert_re_loss_l1.1} parent=15 // pred_region
          %s174 = sand.u32 %s32, 1
          %s175 = scalar_lea.sflag [#allocation3], %s174
          %s176 = sand.u32 %s32, 1
          %s177 = smul.addr %s176, 16
          %s178 = scalar_lea.vmem [#allocation2], %s177
          %s180 = ssub.s32 256, 256
          %181 = vsyncadd %s175, %s180
          %s182 = smul.addr %s22, 2
          %s183 = smul.addr %s182, 128
          %s184 = scalar_lea.hbm %s0, %s183
          %s185 = sshll.u32 %s178, 4
          %s186 = int_to_ptr.vmem [resolvable:$true] %s185
          %191 = dma.hbm_to_vmem [thread:$0]  %s184, 256, %s186, %s175, 128, 128, 8
        $region20: #{ucert_re_loss_l1.1} parent=15 // pred_fallthru
          _
        // Predicated region
        $region21: #{ucert_re_loss_l1.1} parent=15 // pred_check
          %p192 = pneg %p68
        $region22: #{ucert_re_loss_l1.1} parent=15 // pred_check_branch
          %194 = sbr.rel (%p192) target = $region24
        $region23: #{ucert_re_loss_l1.1} parent=15 // pred_region
          %s195 = sand.u32 %s22, 1
          %s196 = scalar_lea.sflag [#allocation6], %s195
          %s197 = sand.u32 %s58, 1
          %s198 = smul.addr %s197, 16
          %s199 = scalar_lea.vmem [#allocation5], %s198
          %s201 = ssub.s32 256, 256
          %202 = vsyncadd %s196, %s201
          %s203 = smul.addr %s22, 2
          %s204 = smul.addr %s203, 128
          %s205 = scalar_lea.hbm %s1, %s204
          %s206 = sshll.u32 %s199, 4
          %s207 = int_to_ptr.vmem [resolvable:$true] %s206
          %212 = dma.hbm_to_vmem [thread:$0]  %s205, 256, %s207, %s196, 128, 128, 8
        $region24: #{ucert_re_loss_l1.1} parent=15 // pred_fallthru
          _
        // Predicated region
        $region25: #{ucert_re_loss_l1.1} parent=15 // pred_check
          %p213 = pneg %p94
        $region26: #{ucert_re_loss_l1.1} parent=15 // pred_check_branch
          %215 = sbr.rel (%p213) target = $region28
        $region27: #{ucert_re_loss_l1.1} parent=15 // pred_region
          %s216 = sand.u32 %s22, 1
          %s217 = scalar_lea.sflag [#allocation6], %s216
          %s218 = sand.u32 %s84, 1
          %s219 = smul.addr %s218, 16
          %s220 = scalar_lea.vmem [#allocation7], %s219
          %s222 = ssub.s32 256, 256
          %223 = vsyncadd %s217, %s222
          %s224 = smul.addr %s22, 2
          %s225 = smul.addr %s224, 128
          %s226 = scalar_lea.hbm %s2, %s225
          %s227 = sshll.u32 %s220, 4
          %s228 = int_to_ptr.vmem [resolvable:$true] %s227
          %233 = dma.hbm_to_vmem [thread:$0]  %s226, 256, %s228, %s217, 128, 128, 8
        $region28: #{ucert_re_loss_l1.1} parent=15 // pred_fallthru
          _
        // Predicated region
        $region29: #{ucert_re_loss_l1.1} parent=15 // pred_check
          %p234 = pneg %p120
        $region30: #{ucert_re_loss_l1.1} parent=15 // pred_check_branch
          %236 = sbr.rel (%p234) target = $region32
        $region31: #{ucert_re_loss_l1.1} parent=15 // pred_region
          %s237 = sand.u32 %s110, 1
          %s238 = scalar_lea.sflag [#allocation9], %s237
          %s239 = sand.u32 %s110, 1
          %s240 = smul.addr %s239, 48
          %s241 = scalar_lea.vmem [#allocation8], %s240
          %s243 = ssub.s32 768, 768
          %244 = vsyncadd %s238, %s243
          %s245 = smul.addr %s22, 6
          %s246 = smul.addr %s245, 128
          %s247 = scalar_lea.hbm %s3, %s246
          %s248 = sshll.u32 %s241, 4
          %s249 = int_to_ptr.vmem [resolvable:$true] %s248
          %254 = dma.hbm_to_vmem [thread:$0]  %s247, 768, %s249, %s238, 128, 128, 8
        $region32: #{ucert_re_loss_l1.1} parent=15 // pred_fallthru
          _
      $region16: #{ucert_re_loss_l1.1} parent=5 // pred_fallthru
        _
      %p255 = scmp.le.s32.totalorder 1, %s22
      %p256 = scmp.lt.s32.totalorder %s22, 3
      %p257 = pnand %p255, %p256
      %p258 = pneg %p257
      // Predicated region
      $region33: #{ucert_re_loss_l1.1} parent=5 // pred_check
        _
      $region34: #{ucert_re_loss_l1.1} parent=5 // pred_check_branch
        %260 = sbr.rel (%p257) target = $region36
      $region35: #{ucert_re_loss_l1.1} parent=5 // pred_region
        %s261 = ssub.s32 %s22, 1
        %s262 = sand.u32 %s35, 1
        %s263 = scalar_lea.sflag [#allocation3], %s262
        %s264 = sand.u32 %s35, 1
        %s265 = smul.addr %s264, 16
        %s266 = scalar_lea.vmem [#allocation2], %s265
        // Predicated region
        $region37: #{ucert_re_loss_l1.1} parent=35 // pred_check
          %p267 = pneg %p48
        $region38: #{ucert_re_loss_l1.1} parent=35 // pred_check_branch
          %269 = sbr.rel (%p267) target = $region40
        $region39: #{ucert_re_loss_l1.1} parent=35 // pred_region
          %270 = dma.done %s263, 256
        $region40: #{ucert_re_loss_l1.1} parent=35 // pred_fallthru
          _
        %s271 = sand.u32 %s27, 1
        %s272 = scalar_lea.sflag [#allocation6], %s271
        %s273 = sand.u32 %s61, 1
        %s274 = smul.addr %s273, 16
        %s275 = scalar_lea.vmem [#allocation5], %s274
        // Predicated region
        $region41: #{ucert_re_loss_l1.1} parent=35 // pred_check
          %p276 = pneg %p74
        $region42: #{ucert_re_loss_l1.1} parent=35 // pred_check_branch
          %278 = sbr.rel (%p276) target = $region44
        $region43: #{ucert_re_loss_l1.1} parent=35 // pred_region
          %279 = dma.done %s272, 256
        $region44: #{ucert_re_loss_l1.1} parent=35 // pred_fallthru
          _
        %s280 = sand.u32 %s27, 1
        %s281 = scalar_lea.sflag [#allocation6], %s280
        %s282 = sand.u32 %s87, 1
        %s283 = smul.addr %s282, 16
        %s284 = scalar_lea.vmem [#allocation7], %s283
        // Predicated region
        $region45: #{ucert_re_loss_l1.1} parent=35 // pred_check
          %p285 = pneg %p100
        $region46: #{ucert_re_loss_l1.1} parent=35 // pred_check_branch
          %287 = sbr.rel (%p285) target = $region48
        $region47: #{ucert_re_loss_l1.1} parent=35 // pred_region
          %288 = dma.done %s281, 256
        $region48: #{ucert_re_loss_l1.1} parent=35 // pred_fallthru
          _
        %s289 = sand.u32 %s113, 1
        %s290 = scalar_lea.sflag [#allocation9], %s289
        %s291 = sand.u32 %s113, 1
        %s292 = smul.addr %s291, 48
        %s293 = scalar_lea.vmem [#allocation8], %s292
        // Predicated region
        $region49: #{ucert_re_loss_l1.1} parent=35 // pred_check
          %p294 = pneg %p126
        $region50: #{ucert_re_loss_l1.1} parent=35 // pred_check_branch
          %296 = sbr.rel (%p294) target = $region52
        $region51: #{ucert_re_loss_l1.1} parent=35 // pred_region
          %297 = dma.done %s290, 768
        $region52: #{ucert_re_loss_l1.1} parent=35 // pred_fallthru
          _
        %s298 = sand.u32 %s35, 1
        %s299 = scalar_lea.sflag [#allocation3], %s298
        %s300 = sand.u32 %s35, 1
        %s301 = smul.addr %s300, 16
        %s302 = scalar_lea.vmem [#allocation2], %s301
        %p303 = pneg %p48
        %p304 = pneg %p45
        %s305 = sand.u32 %s27, 1
        %s306 = scalar_lea.sflag [#allocation6], %s305
        %s307 = sand.u32 %s61, 1
        %s308 = smul.addr %s307, 16
        %s309 = scalar_lea.vmem [#allocation5], %s308
        %p310 = pneg %p74
        %p311 = pneg %p71
        %s312 = sand.u32 %s27, 1
        %s313 = scalar_lea.sflag [#allocation6], %s312
        %s314 = sand.u32 %s87, 1
        %s315 = smul.addr %s314, 16
        %s316 = scalar_lea.vmem [#allocation7], %s315
        %p317 = pneg %p100
        %p318 = pneg %p97
        %s319 = sand.u32 %s113, 1
        %s320 = scalar_lea.sflag [#allocation9], %s319
        %s321 = sand.u32 %s113, 1
        %s322 = smul.addr %s321, 48
        %s323 = scalar_lea.vmem [#allocation8], %s322
        %p324 = pneg %p126
        %p325 = pneg %p123
        %p326 = pneg %p152
        %p327 = pneg %p149
        %s328 = sand.u32 %s139, 1
        %s329 = scalar_lea.sflag [#allocation4], %s328
        %s330 = sand.u32 %s139, 1
        %s331 = smul.addr %s330, 8
        %s332 = scalar_lea.vmem [#allocation10], %s331
        %v333 = vld [vmem:[%s266] sm:$0xff]
        %v334 = vld [vmem:[%s266 + $0x8] sm:$0xff]
        %v335 = vld [vmem:[%s275] sm:$0xff]
        %v336 = vld [vmem:[%s275 + $0x8] sm:$0xff]
        %v337 = vld [vmem:[%s284] sm:$0xff]
        %v338 = vld [vmem:[%s284 + $0x8] sm:$0xff]
        %vm339 = vcmp.gt.f32.partialorder %v337, 0.0
        %vm340 = vcmp.gt.f32.partialorder %v338, 0.0
        %v341 = vsub.f32 %v337, %v333
        %v342 = vsub.f32 %v338, %v334
        %v343 = vadd.f32 %v335, 1.0
        %v344 = vadd.f32 %v336, 1.0
        %v345 = vmul.f32 %v341, %v343
        %v346 = vmul.f32 %v342, %v344
        %v347 = vsel %vm339, %v345, 0.0
        %v348 = vsel %vm340, %v346, 0.0
        %v349 = vand.u32 2147483647, %v347
        %v350 = vand.u32 2147483647, %v348
        %vm351 = vcmask 130048
        %v352 = vsel %vm351, %v349, 0.0
        %v353 = vsel %vm351, %v350, 0.0
        %v354 = vadd.f32 %v352, %v353
        %355 = vadd.xlane.f32.xlu0 %v354
        %v356 = vpop.xlane.xlu0 %355
        %v357 = vrot.slane %v356, 4
        %v358 = vadd.f32 %v356, %v357
        %v359 = vrot.slane %v358, 2
        %v360 = vadd.f32 %v358, %v359
        %v361 = vrot.slane %v360, 1
        %v362 = vadd.f32 %v360, %v361
        %s363 = vtos %v362
        %v364 = vmul.f32 %v347, %v347
        %v365 = vmul.f32 %v348, %v348
        %v366 = vsel %vm351, %v364, 0.0
        %v367 = vsel %vm351, %v365, 0.0
        %v368 = vadd.f32 %v366, %v367
        %369 = vadd.xlane.f32.xlu0 %v368
        %v370 = vpop.xlane.xlu0 %369
        %v371 = vrot.slane %v370, 4
        %v372 = vadd.f32 %v370, %v371
        %v373 = vrot.slane %v372, 2
        %v374 = vadd.f32 %v372, %v373
        %v375 = vrot.slane %v374, 1
        %v376 = vadd.f32 %v374, %v375
        %s377 = vtos %v376
        %v378 = vsel %vm339, 1, 0
        %v379 = vsel %vm340, 1, 0
        %v380 = vcvt.s32.f32 %v378
        %v381 = vcvt.s32.f32 %v379
        %v382 = vsel %vm351, %v380, 0.0
        %v383 = vsel %vm351, %v381, 0.0
        %v384 = vadd.f32 %v382, %v383
        %385 = vadd.xlane.f32.xlu0 %v384
        %v386 = vpop.xlane.xlu0 %385
        %v387 = vrot.slane %v386, 4
        %v388 = vadd.f32 %v386, %v387
        %v389 = vrot.slane %v388, 2
        %v390 = vadd.f32 %v388, %v389
        %v391 = vrot.slane %v390, 1
        %v392 = vadd.f32 %v390, %v391
        %s393 = vtos %v392
        %vm394 = vcmask 1047680
        %395 = vrot.lane.b32.xlu0 %v333, 16
        %v396 = vpop.permute.xlu0 %395
        %v397 = vsel %vm394, %v396, %v333
        %398 = vrot.lane.b32.xlu0 %v334, 16
        %v399 = vpop.permute.xlu0 %398
        %v400 = vsel %vm394, %v399, %v334
        %401 = vrot.lane.b32.xlu0 %v397, 16
        %v402 = vpop.permute.xlu0 %401
        %403 = vrot.lane.b32.xlu0 %v400, 16
        %v404 = vpop.permute.xlu0 %403
        %v405 = vsel %vm394, %v402, %v333
        %v406 = vsel %vm394, %v404, %v334
        %409 = vrot.lane.b32.xlu0 %v405, 127
        %v410 = vpop.permute.xlu0 %409
        %411 = vrot.lane.b32.xlu0 %v406, 127
        %v412 = vpop.permute.xlu0 %411
        %v415 = vsub.f32 %v333, %v410
        %v416 = vsub.f32 %v334, %v412
        %v417 = vrot.slane %v333, 1
        %v418 = vrot.slane %v334, 1
        %v419 = vlaneseq
        %v420 = vshrl.u32 %v419, 7
        %vm421 = vcmp.lt.s32.totalorder %v420, 7
        %v422 = vsel %vm421, %v417, %v418
        %v423 = vsel %vm421, %v418, %v417
        %v424 = vsub.f32 %v333, %v422
        %v425 = vsub.f32 %v334, %v423
        %v426 = vld [vmem:[%s293] sm:$0xff]
        %v427 = vld [vmem:[%s293 + $0x8] sm:$0xff]
        %428 = vrot.lane.b32.xlu0 %v426, 16
        %v429 = vpop.permute.xlu0 %428
        %v430 = vsel %vm394, %v429, %v426
        %431 = vrot.lane.b32.xlu0 %v427, 16
        %v432 = vpop.permute.xlu0 %431
        %v433 = vsel %vm394, %v432, %v427
        %434 = vrot.lane.b32.xlu0 %v430, 16
        %v435 = vpop.permute.xlu0 %434
        %436 = vrot.lane.b32.xlu0 %v433, 16
        %v437 = vpop.permute.xlu0 %436
        %v438 = vsel %vm394, %v435, %v426
        %v439 = vsel %vm394, %v437, %v427
        %442 = vrot.lane.b32.xlu0 %v438, 127
        %v443 = vpop.permute.xlu0 %442
        %444 = vrot.lane.b32.xlu0 %v439, 127
        %v445 = vpop.permute.xlu0 %444
        %v448 = vsub.f32 %v426, %v443
        %v449 = vsub.f32 %v427, %v445
        %v450 = vand.u32 2147483647, %v448
        %v451 = vand.u32 2147483647, %v449
        %v452 = vadd.f32 %v450, 0.0
        %v453 = vadd.f32 %v451, 0.0
        %v454 = vrot.slane %v426, 1
        %v455 = vrot.slane %v427, 1
        %v456 = vsel %vm421, %v454, %v455
        %v457 = vsel %vm421, %v455, %v454
        %v458 = vsub.f32 %v426, %v456
        %v459 = vsub.f32 %v427, %v457
        %v460 = vand.u32 2147483647, %v458
        %v461 = vand.u32 2147483647, %v459
        %v462 = vadd.f32 %v460, 0.0
        %v463 = vadd.f32 %v461, 0.0
        %s464 = scalar_lea.vmem %s293, 16 [#allocation8]
        %v465 = vld [vmem:[%s464] sm:$0xff]
        %v466 = vld [vmem:[%s464 + $0x8] sm:$0xff]
        %467 = vrot.lane.b32.xlu0 %v465, 16
        %v468 = vpop.permute.xlu0 %467
        %v469 = vsel %vm394, %v468, %v465
        %470 = vrot.lane.b32.xlu0 %v466, 16
        %v471 = vpop.permute.xlu0 %470
        %v472 = vsel %vm394, %v471, %v466
        %473 = vrot.lane.b32.xlu0 %v469, 16
        %v474 = vpop.permute.xlu0 %473
        %475 = vrot.lane.b32.xlu0 %v472, 16
        %v476 = vpop.permute.xlu0 %475
        %v477 = vsel %vm394, %v474, %v465
        %v478 = vsel %vm394, %v476, %v466
        %481 = vrot.lane.b32.xlu0 %v477, 127
        %v482 = vpop.permute.xlu0 %481
        %483 = vrot.lane.b32.xlu0 %v478, 127
        %v484 = vpop.permute.xlu0 %483
        %v487 = vsub.f32 %v465, %v482
        %v488 = vsub.f32 %v466, %v484
        %v489 = vand.u32 2147483647, %v487
        %v490 = vand.u32 2147483647, %v488
        %v491 = vadd.f32 %v452, %v489
        %v492 = vadd.f32 %v453, %v490
        %v493 = vrot.slane %v465, 1
        %v494 = vrot.slane %v466, 1
        %v495 = vsel %vm421, %v493, %v494
        %v496 = vsel %vm421, %v494, %v493
        %v497 = vsub.f32 %v465, %v495
        %v498 = vsub.f32 %v466, %v496
        %v499 = vand.u32 2147483647, %v497
        %v500 = vand.u32 2147483647, %v498
        %v501 = vadd.f32 %v462, %v499
        %v502 = vadd.f32 %v463, %v500
        %s503 = scalar_lea.vmem %s293, 32 [#allocation8]
        %v504 = vld [vmem:[%s503] sm:$0xff]
        %v505 = vld [vmem:[%s503 + $0x8] sm:$0xff]
        %506 = vrot.lane.b32.xlu0 %v504, 16
        %v507 = vpop.permute.xlu0 %506
        %v508 = vsel %vm394, %v507, %v504
        %509 = vrot.lane.b32.xlu0 %v505, 16
        %v510 = vpop.permute.xlu0 %509
        %v511 = vsel %vm394, %v510, %v505
        %512 = vrot.lane.b32.xlu0 %v508, 16
        %v513 = vpop.permute.xlu0 %512
        %514 = vrot.lane.b32.xlu0 %v511, 16
        %v515 = vpop.permute.xlu0 %514
        %v516 = vsel %vm394, %v513, %v504
        %v517 = vsel %vm394, %v515, %v505
        %520 = vrot.lane.b32.xlu0 %v516, 127
        %v521 = vpop.permute.xlu0 %520
        %522 = vrot.lane.b32.xlu0 %v517, 127
        %v523 = vpop.permute.xlu0 %522
        %v526 = vsub.f32 %v504, %v521
        %v527 = vsub.f32 %v505, %v523
        %v528 = vand.u32 2147483647, %v526
        %v529 = vand.u32 2147483647, %v527
        %v530 = vadd.f32 %v491, %v528
        %v531 = vadd.f32 %v492, %v529
        %v532 = vrot.slane %v504, 1
        %v533 = vrot.slane %v505, 1
        %v534 = vsel %vm421, %v532, %v533
        %v535 = vsel %vm421, %v533, %v532
        %v536 = vsub.f32 %v504, %v534
        %v537 = vsub.f32 %v505, %v535
        %v538 = vand.u32 2147483647, %v536
        %v539 = vand.u32 2147483647, %v537
        %v540 = vadd.f32 %v501, %v538
        %v541 = vadd.f32 %v502, %v539
        %v542 = vrcp.pop 3.0
        %v543 = vmul.f32 %v530, %v542
        %v544 = vmul.f32 %v531, %v542
        %v545 = vsub.f32 0.0, %v543
        %v546 = vsub.f32 0.0, %v544
        %v547 = vmul.f32 %v545, 1.442695
        %v548 = vpow.pop %v547
        %v549 = vmul.f32 %v546, 1.442695
        %v550 = vpow.pop %v549
        %v551 = vmul.f32 %v540, %v542
        %v552 = vmul.f32 %v541, %v542
        %v553 = vsub.f32 0.0, %v551
        %v554 = vsub.f32 0.0, %v552
        %v555 = vmul.f32 %v553, 1.442695
        %v556 = vpow.pop %v555
        %v557 = vmul.f32 %v554, 1.442695
        %v558 = vpow.pop %v557
        %v559 = vlaneseq
        %v560 = vand.u32 %v559, 127
        %v561 = vadd.s32 %v420, 8
        %vm562 = vcmp.lt.s32.totalorder %v560, 15
        %v563 = vand.u32 2147483647, %v415
        %v564 = vand.u32 2147483647, %v416
        %v565 = vmul.f32 %v548, %v563
        %v566 = vmul.f32 %v550, %v564
        %v567 = vsel %vm562, %v565, 0.0
        %v568 = vsel %vm562, %v566, 0.0
        %v569 = vsel %vm351, %v567, 0.0
        %v570 = vsel %vm351, %v568, 0.0
        %v571 = vadd.f32 %v569, %v570
        %572 = vadd.xlane.f32.xlu0 %v571
        %v573 = vpop.xlane.xlu0 %572
        %v574 = vrot.slane %v573, 4
        %v575 = vadd.f32 %v573, %v574
        %v576 = vrot.slane %v575, 2
        %v577 = vadd.f32 %v575, %v576
        %v578 = vrot.slane %v577, 1
        %v579 = vadd.f32 %v577, %v578
        %s580 = vtos %v579
        %vm581 = vcmp.lt.s32.totalorder %v420, 15
        %vm582 = vcmp.lt.s32.totalorder %v561, 15
        %v583 = vand.u32 2147483647, %v424
        %v584 = vand.u32 2147483647, %v425
        %v585 = vmul.f32 %v556, %v583
        %v586 = vmul.f32 %v558, %v584
        %v587 = vsel %vm581, %v585, 0.0
        %v588 = vsel %vm582, %v586, 0.0
        %v589 = vsel %vm351, %v587, 0.0
        %v590 = vsel %vm351, %v588, 0.0
        %v591 = vadd.f32 %v589, %v590
        %592 = vadd.xlane.f32.xlu0 %v591
        %v593 = vpop.xlane.xlu0 %592
        %v594 = vrot.slane %v593, 4
        %v595 = vadd.f32 %v593, %v594
        %v596 = vrot.slane %v595, 2
        %v597 = vadd.f32 %v595, %v596
        %v598 = vrot.slane %v597, 1
        %v599 = vadd.f32 %v597, %v598
        %s600 = vtos %v599
        %vm601 = vcmp.eq.s32.totalorder %v420, 0
        %v602 = vstv %s363
        %v603 = vsel %vm601, %v602, 0.0
        %vm604 = vcmp.eq.s32.totalorder %v420, 1
        %v605 = vstv %s377
        %v606 = vsel %vm604, %v605, %v603
        %vm607 = vcmp.eq.s32.totalorder %v420, 2
        %v608 = vstv %s393
        %v609 = vsel %vm607, %v608, %v606
        %vm610 = vcmp.eq.s32.totalorder %v420, 3
        %v611 = vstv %s580
        %v612 = vsel %vm610, %v611, %v609
        %vm613 = vcmp.eq.s32.totalorder %v420, 4
        %v614 = vstv %s600
        %v615 = vsel %vm613, %v614, %v612
        %616 = vst [vmem:[%s332] sm:$0xff] %v615
        %s617 = sand.u32 %s139, 1
        %s618 = scalar_lea.sflag [#allocation4], %s617
        %s619 = sand.u32 %s139, 1
        %s620 = smul.addr %s619, 8
        %s621 = scalar_lea.vmem [#allocation10], %s620
        // Predicated region
        $region53: #{ucert_re_loss_l1.1} parent=35 // pred_check
          %p622 = pneg %p149
        $region54: #{ucert_re_loss_l1.1} parent=35 // pred_check_branch
          %624 = sbr.rel (%p622) target = $region56
        $region55: #{ucert_re_loss_l1.1} parent=35 // pred_region
          %s626 = ssub.s32 128, 128
          %627 = vsyncadd %s618, %s626
          %s628 = smul.addr %s27, 128
          %s629 = scalar_lea.hbm %s4, %s628
          %s631 = sshll.u32 %s621, 4
          %s632 = int_to_ptr.vmem [resolvable:$true] %s631
          %634 = dma.vmem_to_hbm [thread:$0]  %s632, 128, %s629, %s618
        $region56: #{ucert_re_loss_l1.1} parent=35 // pred_fallthru
          _
      $region36: #{ucert_re_loss_l1.1} parent=5 // pred_fallthru
        _
      %p635 = scmp.le.s32.totalorder 2, %s22
      // Predicated region
      $region57: #{ucert_re_loss_l1.1} parent=5 // pred_check
        %p636 = pneg %p635
      $region58: #{ucert_re_loss_l1.1} parent=5 // pred_check_branch
        %638 = sbr.rel (%p636) target = $region60
      $region59: #{ucert_re_loss_l1.1} parent=5 // pred_region
        %s639 = ssub.s32 %s22, 2
        // Predicated region
        $region61: #{ucert_re_loss_l1.1} parent=59 // pred_check
          %p640 = pneg %p155
        $region62: #{ucert_re_loss_l1.1} parent=59 // pred_check_branch
          %642 = sbr.rel (%p640) target = $region64
        $region63: #{ucert_re_loss_l1.1} parent=59 // pred_region
          %s643 = sand.u32 %s140, 1
          %s644 = scalar_lea.sflag [#allocation4], %s643
          %s645 = sand.u32 %s140, 1
          %s646 = smul.addr %s645, 8
          %s647 = scalar_lea.vmem [#allocation10], %s646
          %648 = dma.done %s644, 128
        $region64: #{ucert_re_loss_l1.1} parent=59 // pred_fallthru
          _
      $region60: #{ucert_re_loss_l1.1} parent=5 // pred_fallthru
        _
    $region6: #{ucert_re_loss_l1.1} parent=1 // loop_footer
      %s26 = sadd.s32 1, %s22
    $region7: #{ucert_re_loss_l1.1} parent=1 // loop_footer_branch
      %21 = sbr.rel target = $region3
    $region8: #{ucert_re_loss_l1.1} parent=1 // loop_exit
      _
    %649 = vsyncpa [#allocation3], 1
    %s650 = scalar_lea.sflag [#allocation3], 1
    %651 = vsyncpa %s650, 1
    %652 = vsyncpa [#allocation6], 1
    %s653 = scalar_lea.sflag [#allocation6], 1
    %654 = vsyncpa %s653, 1
    %655 = vsyncpa [#allocation9], 1
    %s656 = scalar_lea.sflag [#allocation9], 1
    %657 = vsyncpa %s656, 1
    %658 = vsyncpa [#allocation4], 1
    %s659 = scalar_lea.sflag [#allocation4], 1
    %660 = vsyncpa %s659, 1

</llo_original>
